<compile_context>
chip_gen: v7x
topology: tpu7x:2x2x1
jax: 0.10.0
libtpu: 0.0.40
codegen_flags: <defaults>
</compile_context>

<pallas_src>
import jax
import jax.numpy as jnp
from jax.experimental import pallas as pl
from jax.experimental.pallas import tpu as pltpu


def _copy_kernel(x_ref, o_ref):
    # Identity copy of the current tile (the only data movement of unsqueeze).
    o_ref[...] = x_ref[...]


def _cdiv(a: int, b: int) -> int:
    return -(-a // b)


def _round_up(n: int, m: int) -> int:
    return _cdiv(n, m) * m


def _sublane_multiple(dtype) -> int:
    # Packed sublane count: f32 -> 8, bf16/f16 -> 16, 8-bit -> 32, 4-bit -> 64.
    dt = jnp.dtype(dtype)
    if dt.name in ("int4", "uint4", "float4_e2m1fn"):
        return 64
    itemsize = dt.itemsize
    if itemsize >= 4:
        return 8
    if itemsize == 2:
        return 16
    return 32


def _vmem_capacity_bytes() -> int:
    try:
        return int(pltpu.get_tpu_info().vmem_capacity_bytes)
    except Exception:
        return 64 * 1024 * 1024  # conservative: v7x per-TensorCore VMEM


def _lane_dense_view(total: int):
    # Largest lane-dense width (multiple of 128) that evenly divides `total`.
    for lanes in (8192, 4096, 2048, 1024, 512, 256, 128):
        if total % lanes == 0:
            return total // lanes, lanes
    return None


def _pallas_identity_copy(x: jax.Array) -> jax.Array:
    """Tiled, pipelined HBM->VMEM->HBM identity copy of x as a flat 2-D view."""
    total = int(x.size)
    itemsize = jnp.dtype(x.dtype).itemsize
    sub = _sublane_multiple(x.dtype)
    vmem_cap = _vmem_capacity_bytes()
    # Device-aware tile budget: 16 MiB on 128 MiB-VMEM parts (v5e/v6e),
    # 8 MiB on 64 MiB parts (v7x).  Multi-buffered in + out stays well inside
    # physical VMEM in both cases.
    target_tile_bytes = (16 << 20) if vmem_cap >= (96 << 20) else (8 << 20)

    # Pick a 2-D view of the flat data.
    view = _lane_dense_view(total)
    if view is not None:
        rows, cols = view
    elif (x.ndim >= 2
          and _round_up(x.shape[-1], 128) * itemsize * sub <= target_tile_bytes):
        cols = int(x.shape[-1])   # full-extent last dim (exempt from the 128 rule)
        rows = total // cols
    else:
        rows, cols = 1, total     # 1-D view, tiled along lanes
    flat = x.reshape(rows, cols)
    total_bytes = total * itemsize

    # Tile sizes: block dims are either full-extent or (sub, 128)-aligned;
    # ragged trailing tiles are masked automatically by the cdiv grid.
    if rows == 1:
        tile_rows = 1
        # A (1, n) block pads its sublane dim up to `sub`; budget for that.
        budget_cols = max(128, (target_tile_bytes // (itemsize * sub)) // 128 * 128)
        tile_cols = min(cols, budget_cols)
    else:
        tile_cols = cols
        row_bytes = _round_up(cols, 128) * itemsize
        tile_rows = max(sub, (target_tile_bytes // row_bytes) // sub * sub)
        tile_rows = min(tile_rows, rows)
        steps = _cdiv(rows, tile_rows)
        # Guarantee >=2 balanced steps for non-trivial copies so both v7x
        # TensorCores (megacore) get work; balancing avoids a tiny ragged tail.
        if steps == 1 and rows >= 2 * sub and total_bytes >= (2 << 20):
            steps = 2
        if steps > 1:
            tile_rows = min(rows, _round_up(_cdiv(rows, steps), sub))

    grid = (_cdiv(rows, tile_rows), _cdiv(cols, tile_cols))
    n_steps = grid[0] * grid[1]

    # Padded VMEM footprint of one block (sublane/lane padding included).
    tile_vmem = (_round_up(min(tile_rows, rows), sub)
                 * _round_up(min(tile_cols, cols), 128) * itemsize)
    deep = n_steps >= 3  # 3-deep input pipelining only pays off on longer grids
    n_bufs = (3 + 2) if deep else (2 + 2)
    vmem_limit = max(16 << 20, n_bufs * tile_vmem + (2 << 20))
    vmem_limit = int(min(vmem_limit, vmem_cap - (4 << 20)))  # never exceed physical

    params = pltpu.CompilerParams(
        dimension_semantics=("parallel", "parallel"),
        vmem_limit_bytes=vmem_limit,
    )
    out_shape = jax.ShapeDtypeStruct((rows, cols), x.dtype)
    block = (tile_rows, tile_cols)
    index_map = lambda i, j: (i, j)
    out_spec = pl.BlockSpec(block, index_map)

    def _call(in_spec):
        return pl.pallas_call(
            _copy_kernel,
            out_shape=out_shape,
            grid=grid,
            in_specs=[in_spec],
            out_specs=out_spec,
            compiler_params=params,
        )(flat)

    if deep and hasattr(pl, "Buffered"):
        try:
            buffered = pl.BlockSpec(block, index_map, pipeline_mode=pl.Buffered(3))
            return _call(buffered)
        except Exception:
            pass  # fall back to default double-buffering
    return _call(pl.BlockSpec(block, index_map))


def unsqueeze(x: jax.Array, dim: int, materialize: bool = False) -> jax.Array:
    """Pallas-backed equivalent of torch.Tensor.unsqueeze(dim).

    Default is the zero-copy metadata path (matches torch's view semantics and
    removes the 2x-bytes HBM round-trip flagged by the perf review).
    materialize=True routes the data through the tiled Pallas identity-copy
    kernel and returns a fresh buffer with the new shape.
    """
    ndim = x.ndim
    if dim < 0:
        dim = dim + ndim + 1
    assert 0 <= dim <= ndim, f"invalid unsqueeze dim {dim} for rank {ndim}"
    new_shape = x.shape[:dim] + (1,) + x.shape[dim:]
    if not materialize or x.size == 0:
        # TODO(synk): unsqueeze is metadata-only; there is no Pallas work to do
        # here — the kernel above exists only for explicit materialization.
        return jnp.reshape(x, new_shape)
    return _pallas_identity_copy(x).reshape(new_shape)


if __name__ == "__main__":
    key = jax.random.PRNGKey(0)
    # Small NCHW-like input consistent with a typical conv-model tensor.
    x = jax.random.normal(key, (2, 4, 16, 16), dtype=jnp.float32)

    dim = 1  # module constructed with some dim; use dim=1 as the example

    # Default (fast) path: metadata-only reshape, zero HBM traffic.
    y_fast = jax.block_until_ready(unsqueeze(x, dim))
    assert y_fast.shape == (2, 1, 4, 16, 16), y_fast.shape
    assert jnp.array_equal(y_fast, jnp.expand_dims(x, dim))

    # Pallas kernel path (materialized copy): run the kernel and block on it.
    y = jax.block_until_ready(unsqueeze(x, dim, materialize=True))
    assert y.shape == (2, 1, 4, 16, 16), y.shape
    assert y.dtype == x.dtype
    assert jnp.array_equal(y, jnp.expand_dims(x, dim))

    # Negative dim, like torch allows.
    y2 = jax.block_until_ready(unsqueeze(x, -1, materialize=True))
    assert y2.shape == (2, 4, 16, 16, 1)
    assert jnp.array_equal(y2, jnp.expand_dims(x, -1))

    # bf16 path (different sublane packing).
    xb = x.astype(jnp.bfloat16)
    y3 = jax.block_until_ready(unsqueeze(xb, 0, materialize=True))
    assert y3.shape == (1, 2, 4, 16, 16)
    assert jnp.array_equal(y3, jnp.expand_dims(xb, 0))

    # Element count not divisible by 128 -> row-tiled full-extent-cols fallback.
    x4 = jax.random.normal(jax.random.PRNGKey(1), (24, 7), dtype=jnp.float32)
    y4 = jax.block_until_ready(unsqueeze(x4, 1, materialize=True))
    assert y4.shape == (24, 1, 7)
    assert jnp.array_equal(y4, jnp.expand_dims(x4, 1))

    # 1-D odd length -> lane-tiled (1, N) fallback.
    x5 = jax.random.normal(jax.random.PRNGKey(2), (1037,), dtype=jnp.float32)
    y5 = jax.block_until_ready(unsqueeze(x5, 0, materialize=True))
    assert y5.shape == (1, 1037)
    assert jnp.array_equal(y5, jnp.expand_dims(x5, 0))

    # Lane-dense path with >=2 balanced parallel grid steps (megacore-friendly).
    x6 = jax.random.normal(jax.random.PRNGKey(3), (512, 1024), dtype=jnp.float32)
    y6 = jax.block_until_ready(unsqueeze(x6, 0, materialize=True))
    assert y6.shape == (1, 512, 1024)
    assert jnp.array_equal(y6, jnp.expand_dims(x6, 0))

    print("KERNEL_OK")
</pallas_src>

<mosaic_0001>
module attributes {stable_mosaic.version = 11 : i64} {
  func.func @_copy_kernel(%arg0: i32, %arg1: i32, %arg2: memref<1x2048xf32, #tpu.memory_space<vmem>>, %arg3: memref<1x2048xf32, #tpu.memory_space<vmem>>) attributes {dimension_semantics = [#tpu.dimension_semantics<parallel>, #tpu.dimension_semantics<parallel>], iteration_bounds = array<i64: 1, 1>, scalar_prefetch = 0 : i64, scratch_operands = 0 : i64, tpu.core_type = #tpu.core_type<tc>, window_params = [{transform_indices = @transform_0, window_bounds = array<i64: 1, 2048>}, {transform_indices = @transform_1, window_bounds = array<i64: 1, 2048>}]} {
    %c0 = arith.constant 0 : index
    %c0_0 = arith.constant 0 : index
    %0 = vector.load %arg2[%c0, %c0_0] : memref<1x2048xf32, #tpu.memory_space<vmem>>, vector<1x2048xf32>
    %c0_1 = arith.constant 0 : index
    %c0_2 = arith.constant 0 : index
    %1 = vector.load %arg3[%c0_1, %c0_2] : memref<1x2048xf32, #tpu.memory_space<vmem>>, vector<1x2048xf32>
    tpu.vector_store %arg3[%c0_1, %c0_2], %0 {strides = array<i32>} : memref<1x2048xf32, #tpu.memory_space<vmem>>, vector<1x2048xf32>,
    return
  }
  func.func @transform_0(%arg0: i32, %arg1: i32) -> (i32, i32) {
    %c0_i32 = arith.constant 0 : i32
    return %arg0, %arg1 : i32, i32
  }
  func.func @transform_1(%arg0: i32, %arg1: i32) -> (i32, i32) {
    %c0_i32 = arith.constant 0 : i32
    return %arg0, %arg1 : i32, i32
  }
}

</mosaic_0001>

<llo_original>
// kernel: tpu_custom_call.1
$region0: #{tpu_custom_call.1}
  #allocation0 [shape = 'u32[]', space=smem, size = 0x4, offset = 0x4, fixed_abs, tag = 'smem constant byte address 0x4 - core index']
  #allocation1 [shape = 'u32[144,128]{1,0:T(1,128)}', space=vmem, size = 0x12000, scoped, tag = 'internal scratch']
  %s0 = inlined_call_operand.hbm [shape: f32[1,2048], index: 0, kind: input, shape index: {}]
  %s1 = inlined_call_operand.hbm [shape: f32[1,2048], index: 1, kind: output, shape index: {}]
  %s2 = sld [smem:[#allocation0]]
  $region18: #{tpu_custom_call.1} parent=0
    _
  %s4 = ssub.s32 1, %s2
  %s5 = scalar_select 0, %s4, %s2
  $region1: #{tpu_custom_call.1} parent=0
    #allocation2 [shape = 'u8[8192]{0}', space=vmem, size = 0x2000, scoped, tag = 'input window, operand 0, single buffered']
    #allocation3 [shape = 's32[1]{0}', space=sflag, size = 0x4, scoped, tag = 'scoped memory for tpu_custom_call.1']
    #allocation4 [shape = 's32[1]{0}', space=sflag, size = 0x4, scoped, tag = 'scoped memory for tpu_custom_call.1']
    #allocation5 [shape = 'u8[8192]{0}', space=vmem, size = 0x2000, scoped, tag = 'output window, operand 0, single buffered']
    %6 = vsyncpa [#allocation3], 0
    %7 = vsyncpa [#allocation4], 0
    // Predicated region
    $region2: #{tpu_custom_call.1} parent=1 // pred_check
      _
    $region3: #{tpu_custom_call.1} parent=1 // pred_check_branch
      %9 = sbr.rel (0) target = $region5
    $region4: #{tpu_custom_call.1} parent=1 // pred_region
      %s11 = ssub.s32 256, 256
      %12 = vsyncadd [#allocation3], %s11
      %s14 = sshll.u32 [#allocation2], 4
      %s15 = int_to_ptr.vmem [resolvable:$true] %s14
      %17 = dma.hbm_to_vmem [thread:$0]  %s0, 256, %s15, [#allocation3]
    $region5: #{tpu_custom_call.1} parent=1 // pred_fallthru
      _
    // Predicated region
    $region6: #{tpu_custom_call.1} parent=1 // pred_check
      _
    $region7: #{tpu_custom_call.1} parent=1 // pred_check_branch
      %19 = sbr.rel (0) target = $region9
    $region8: #{tpu_custom_call.1} parent=1 // pred_region
      %20 = dma.done [#allocation3], 256
    $region9: #{tpu_custom_call.1} parent=1 // pred_fallthru
      _
    %v21 = vld [vmem:[#allocation2] sm:$0xff]
    %v22 = vld [vmem:[#allocation2 + $0x8] sm:$0xff]
    %23 = vst [vmem:[#allocation5] sm:$0xff] %v21
    %24 = vst [vmem:[#allocation5 + $0x8] sm:$0xff] %v22
    // Predicated region
    $region10: #{tpu_custom_call.1} parent=1 // pred_check
      _
    $region11: #{tpu_custom_call.1} parent=1 // pred_check_branch
      %26 = sbr.rel (0) target = $region13
    $region12: #{tpu_custom_call.1} parent=1 // pred_region
      %s28 = ssub.s32 256, 256
      %29 = vsyncadd [#allocation4], %s28
      %s31 = sshll.u32 [#allocation5], 4
      %s32 = int_to_ptr.vmem [resolvable:$true] %s31
      %34 = dma.vmem_to_hbm [thread:$0]  %s32, 256, %s1, [#allocation4]
    $region13: #{tpu_custom_call.1} parent=1 // pred_fallthru
      _
    // Predicated region
    $region14: #{tpu_custom_call.1} parent=1 // pred_check
      _
    $region15: #{tpu_custom_call.1} parent=1 // pred_check_branch
      %36 = sbr.rel (0) target = $region17
    $region16: #{tpu_custom_call.1} parent=1 // pred_region
      %37 = dma.done [#allocation4], 256
    $region17: #{tpu_custom_call.1} parent=1 // pred_fallthru
      _
    %38 = vsyncpa [#allocation3], 1
    %39 = vsyncpa [#allocation4], 1

</llo_original>
